<compile_context>
chip_gen: v5e
topology: v5e:2x2
jax: 0.10.0
libtpu: 0.0.40
codegen_flags: <defaults>
</compile_context>

<pallas_src>
import functools

import jax
import jax.numpy as jnp
from jax.experimental import pallas as pl
from jax.experimental.pallas import tpu as pltpu

N_IN = 28 * 28      # 784
N_HID = 128
N_OUT = 10
N_OUT_PAD = 128     # lane-dense padded output width


def _round_up(x, m):
    return ((x + m - 1) // m) * m


def _mlp_kernel(x_ref, w1_ref, b1_ref, w2_ref, b2_ref, o_ref):
    # x_ref:  (TB, 784)          w1_ref: (784, 128)   b1_ref: (1, 128) f32
    # w2_ref: (128, 128 padded)  b2_ref: (1, 128) f32 o_ref:  (TB, 128)
    x = x_ref[...]

    # fc1 (MXU, f32 accumulate) + bias + ReLU (VPU, f32)
    h = jnp.dot(x, w1_ref[...], preferred_element_type=jnp.float32)
    h = jnp.maximum(h + b1_ref[...], 0.0)

    # fc2 on the MXU against the lane-dense (128, 128) padded weight.
    h = h.astype(w2_ref.dtype)
    y = jnp.dot(h, w2_ref[...], preferred_element_type=jnp.float32)
    y = y + b2_ref[...]

    o_ref[...] = y.astype(o_ref.dtype)


def prepare_params(w1, b1, w2, b2, *, param_dtype=jnp.float32):
    """One-time parameter prep (hoisted out of the per-call hot path).

    w1: (784, 128), b1: (128,) or (1, 128), w2: (128, 10), b2: (10,) or (1, 10)
    (torch Linear weights transposed to (in, out)).  Returns params with fc2
    zero-padded to 128 lane-dense output columns; biases kept in f32.
    """
    w1c = jnp.asarray(w1, param_dtype).reshape(N_IN, N_HID)
    b1c = jnp.asarray(b1, jnp.float32).reshape(1, N_HID)
    w2p = jnp.zeros((N_HID, N_OUT_PAD), param_dtype)
    w2p = w2p.at[:, :N_OUT].set(jnp.asarray(w2, param_dtype).reshape(N_HID, N_OUT))
    b2p = jnp.zeros((1, N_OUT_PAD), jnp.float32)
    b2p = b2p.at[:, :N_OUT].set(jnp.asarray(b2, jnp.float32).reshape(1, N_OUT))
    return w1c, b1c, w2p, b2p


@functools.partial(jax.jit, static_argnames=("tb", "out_dtype", "return_padded"))
def simplenet_forward(x, w1c, b1c, w2p, b2p, *, tb=2048, out_dtype=None,
                      return_padded=False):
    """x: any shape reshapeable to (-1, 784); dtype used as-is (no hidden cast).

    Returns (B, 10) by default, or the lane-dense (B, 128) buffer when
    return_padded=True (avoids the 128->10 column-slice copy; cols 10..127 are
    exact zeros).  out_dtype defaults to x.dtype.
    """
    x2d = x.reshape(-1, N_IN)
    B = x2d.shape[0]
    xdt = x2d.dtype
    out_dt = jnp.dtype(out_dtype) if out_dtype is not None else xdt

    # Sublane granularity: 8 rows for 4-byte dtypes, 16 for 2-byte (bf16).
    sublane = 16 if (xdt.itemsize == 2 or out_dt.itemsize == 2) else 8

    # Batch tile: capped so the grid has >=2 steps whenever B allows it
    # (so v7x's two TensorCores both get work via the "parallel" batch axis).
    tb_eff = max(sublane, min(int(tb), _round_up(pl.cdiv(B, 2), sublane)))
    grid = (pl.cdiv(B, tb_eff),)

    wbytes = jnp.dtype(w1c.dtype).itemsize
    cost = pl.CostEstimate(
        flops=2 * B * N_IN * N_HID + 2 * B * N_HID * N_OUT_PAD,
        transcendentals=0,
        bytes_accessed=(
            B * N_IN * xdt.itemsize                        # x
            + (N_IN * N_HID + N_HID * N_OUT_PAD) * wbytes  # weights
            + (N_HID + N_OUT_PAD) * 4                      # biases (f32)
            + B * N_OUT_PAD * out_dt.itemsize              # output
        ),
    )

    # Explicit scoped-VMEM budget: covers TB=2048 f32 on v5e's 16 MiB default
    # limit, and stays well under v7x's 64 MiB physical VMEM.
    vmem_est = (
        2 * tb_eff * N_IN * xdt.itemsize                   # x blocks (dbuf)
        + 2 * tb_eff * N_OUT_PAD * out_dt.itemsize         # out blocks (dbuf)
        + 2 * (N_IN * N_HID + N_HID * N_OUT_PAD) * wbytes  # weights (dbuf)
        + 2 * 2 * N_OUT_PAD * 4                            # biases (dbuf, f32)
        + 2 * tb_eff * N_OUT_PAD * 4                       # h / y f32 temps
    )
    vmem_limit = int(min(max(2 * vmem_est, 32 * 2**20), 48 * 2**20))

    out = pl.pallas_call(
        _mlp_kernel,
        out_shape=jax.ShapeDtypeStruct((B, N_OUT_PAD), out_dt),
        grid_spec=pl.GridSpec(
            grid=grid,
            in_specs=[
                pl.BlockSpec((tb_eff, N_IN), lambda i: (i, 0)),      # x: tiled
                pl.BlockSpec((N_IN, N_HID), lambda i: (0, 0)),       # w1: resident
                pl.BlockSpec((1, N_HID), lambda i: (0, 0)),          # b1: resident
                pl.BlockSpec((N_HID, N_OUT_PAD), lambda i: (0, 0)),  # w2: resident
                pl.BlockSpec((1, N_OUT_PAD), lambda i: (0, 0)),      # b2: resident
            ],
            out_specs=pl.BlockSpec((tb_eff, N_OUT_PAD), lambda i: (i, 0)),
        ),
        compiler_params=pltpu.CompilerParams(
            dimension_semantics=("parallel",),
            vmem_limit_bytes=vmem_limit,
        ),
        cost_estimate=cost,
    )(x2d, w1c, b1c, w2p, b2p)

    if return_padded:
        return out
    return out[:, :N_OUT]


def init_params(key):
    """Deterministic init mimicking torch.nn.Linear defaults (U[-1/sqrt(fan_in), +))."""
    k1, k2, k3, k4 = jax.random.split(key, 4)
    fan1 = N_IN
    fan2 = N_HID
    lim1 = 1.0 / jnp.sqrt(jnp.float32(fan1))
    lim2 = 1.0 / jnp.sqrt(jnp.float32(fan2))
    # stored as (in_features, out_features) — transpose of torch's layout
    w1 = jax.random.uniform(k1, (fan1, N_HID), jnp.float32, -lim1, lim1)
    b1 = jax.random.uniform(k2, (1, N_HID), jnp.float32, -lim1, lim1)
    w2 = jax.random.uniform(k3, (fan2, N_OUT), jnp.float32, -lim2, lim2)
    b2 = jax.random.uniform(k4, (1, N_OUT), jnp.float32, -lim2, lim2)
    return w1, b1, w2, b2


def _reference(x, w1, b1, w2, b2):
    x2d = x.reshape(-1, N_IN).astype(jnp.float32)
    return jnp.maximum(x2d @ w1 + b1.reshape(1, -1), 0.0) @ w2 + b2.reshape(1, -1)


if __name__ == "__main__":
    key = jax.random.PRNGKey(0)
    kx, kx2, kp = jax.random.split(key, 3)

    w1, b1, w2, b2 = init_params(kp)
    # One-time prep (pad/cast/reshape) outside the forward hot path.
    p_f32 = prepare_params(w1, b1, w2, b2, param_dtype=jnp.float32)

    # --- Small MNIST-like batch: (2, 1, 28, 28), f32 path, tight tolerance ---
    x_small = jax.random.normal(kx, (2, 1, 28, 28), jnp.float32)
    out_small = jax.block_until_ready(simplenet_forward(x_small, *p_f32))
    ref_small = _reference(x_small, w1, b1, w2, b2)
    assert out_small.shape == (2, N_OUT)
    assert jnp.allclose(out_small, ref_small, atol=1e-4, rtol=1e-4)

    # --- Larger ragged batch: multi-step grid + masked partial last block ----
    x_big = jax.random.normal(kx2, (300, 1, 28, 28), jnp.float32)
    out_big = jax.block_until_ready(simplenet_forward(x_big, *p_f32, tb=128))
    ref_big = _reference(x_big, w1, b1, w2, b2)
    assert out_big.shape == (300, N_OUT)
    assert jnp.allclose(out_big, ref_big, atol=1e-4, rtol=1e-4)

    # --- Padded-output variant: skips the 128->10 column-slice copy ----------
    out_pad = jax.block_until_ready(
        simplenet_forward(x_big, *p_f32, tb=128, return_padded=True)
    )
    assert out_pad.shape == (300, N_OUT_PAD)
    assert jnp.allclose(out_pad[:, :N_OUT], ref_big, atol=1e-4, rtol=1e-4)
    assert jnp.allclose(out_pad[:, N_OUT:], 0.0, atol=1e-6)

    # --- bf16 path: only when x is already bf16 at rest (no wrapper cast) ----
    p_bf16 = prepare_params(w1, b1, w2, b2, param_dtype=jnp.bfloat16)
    x_bf16 = x_big.astype(jnp.bfloat16)   # stands in for bf16-at-rest activations
    out_bf16 = jax.block_until_ready(
        simplenet_forward(x_bf16, *p_bf16, tb=128, out_dtype=jnp.float32)
    )
    assert out_bf16.shape == (300, N_OUT)
    assert jnp.allclose(out_bf16, ref_big, atol=5e-2, rtol=5e-2)

    print("KERNEL_OK")
</pallas_src>

<mosaic_0001>
module attributes {stable_mosaic.version = 11 : i64} {
  func.func @_mlp_kernel(%arg0: i32, %arg1: memref<8x784xf32, #tpu.memory_space<vmem>>, %arg2: memref<784x128xf32, #tpu.memory_space<vmem>>, %arg3: memref<1x128xf32, #tpu.memory_space<vmem>>, %arg4: memref<128x128xf32, #tpu.memory_space<vmem>>, %arg5: memref<1x128xf32, #tpu.memory_space<vmem>>, %arg6: memref<8x128xf32, #tpu.memory_space<vmem>>) attributes {dimension_semantics = [#tpu.dimension_semantics<parallel>], iteration_bounds = array<i64: 1>, scalar_prefetch = 0 : i64, scratch_operands = 0 : i64, tpu.core_type = #tpu.core_type<tc>, window_params = [{transform_indices = @transform_0, window_bounds = array<i64: 8, 784>}, {pipeline_mode = #tpu.pipeline_mode<synchronous>, transform_indices = @transform_1, window_bounds = array<i64: 784, 128>}, {pipeline_mode = #tpu.pipeline_mode<synchronous>, transform_indices = @transform_2, window_bounds = array<i64: 1, 128>}, {pipeline_mode = #tpu.pipeline_mode<synchronous>, transform_indices = @transform_3, window_bounds = array<i64: 128, 128>}, {pipeline_mode = #tpu.pipeline_mode<synchronous>, transform_indices = @transform_4, window_bounds = array<i64: 1, 128>}, {transform_indices = @transform_5, window_bounds = array<i64: 8, 128>}]} {
    %c0 = arith.constant 0 : index
    %c0_0 = arith.constant 0 : index
    %0 = vector.load %arg1[%c0, %c0_0] : memref<8x784xf32, #tpu.memory_space<vmem>>, vector<8x784xf32>
    %c0_1 = arith.constant 0 : index
    %c0_2 = arith.constant 0 : index
    %1 = vector.load %arg2[%c0_1, %c0_2] : memref<784x128xf32, #tpu.memory_space<vmem>>, vector<784x128xf32>
    %cst = arith.constant dense<0.000000e+00> : vector<8x128xf32>
    %2 = tpu.matmul %0, %1, %cst {dimension_numbers = #tpu.dot_dimension_numbers<[1], [0], [0], [1], [0, 0, 1, 1], [], []>} : vector<8x784xf32>, vector<784x128xf32>, vector<8x128xf32> -> vector<8x128xf32>
    %c0_3 = arith.constant 0 : index
    %c0_4 = arith.constant 0 : index
    %3 = vector.load %arg3[%c0_3, %c0_4] : memref<1x128xf32, #tpu.memory_space<vmem>>, vector<1x128xf32>
    %4 = vector.broadcast %3 : vector<1x128xf32> to vector<8x128xf32>
    %5 = arith.addf %2, %4 : vector<8x128xf32>
    %cst_5 = arith.constant 0.000000e+00 : f32
    %6 = vector.broadcast %cst_5 : f32 to vector<8x128xf32>
    %7 = arith.maximumf %5, %6 : vector<8x128xf32>
    %c0_6 = arith.constant 0 : index
    %c0_7 = arith.constant 0 : index
    %8 = vector.load %arg4[%c0_6, %c0_7] : memref<128x128xf32, #tpu.memory_space<vmem>>, vector<128x128xf32>
    %cst_8 = arith.constant dense<0.000000e+00> : vector<8x128xf32>
    %9 = tpu.matmul %7, %8, %cst_8 {dimension_numbers = #tpu.dot_dimension_numbers<[1], [0], [0], [1], [0, 0, 1, 1], [], []>} : vector<8x128xf32>, vector<128x128xf32>, vector<8x128xf32> -> vector<8x128xf32>
    %c0_9 = arith.constant 0 : index
    %c0_10 = arith.constant 0 : index
    %10 = vector.load %arg5[%c0_9, %c0_10] : memref<1x128xf32, #tpu.memory_space<vmem>>, vector<1x128xf32>
    %11 = vector.broadcast %10 : vector<1x128xf32> to vector<8x128xf32>
    %12 = arith.addf %9, %11 : vector<8x128xf32>
    %c0_11 = arith.constant 0 : index
    %c0_12 = arith.constant 0 : index
    %13 = vector.load %arg6[%c0_11, %c0_12] : memref<8x128xf32, #tpu.memory_space<vmem>>, vector<8x128xf32>
    tpu.vector_store %arg6[%c0_11, %c0_12], %12 {strides = array<i32>} : memref<8x128xf32, #tpu.memory_space<vmem>>, vector<8x128xf32>,
    return
  }
  func.func @transform_0(%arg0: i32) -> (i32, i32) {
    %c0_i32 = arith.constant 0 : i32
    %c0_i32_0 = arith.constant 0 : i32
    return %arg0, %c0_i32 : i32, i32
  }
  func.func @transform_1(%arg0: i32) -> (i32, i32) {
    %c0_i32 = arith.constant 0 : i32
    %c0_i32_0 = arith.constant 0 : i32
    %c0_i32_1 = arith.constant 0 : i32
    return %c0_i32, %c0_i32_0 : i32, i32
  }
  func.func @transform_2(%arg0: i32) -> (i32, i32) {
    %c0_i32 = arith.constant 0 : i32
    %c0_i32_0 = arith.constant 0 : i32
    %c0_i32_1 = arith.constant 0 : i32
    return %c0_i32, %c0_i32_0 : i32, i32
  }
  func.func @transform_3(%arg0: i32) -> (i32, i32) {
    %c0_i32 = arith.constant 0 : i32
    %c0_i32_0 = arith.constant 0 : i32
    %c0_i32_1 = arith.constant 0 : i32
    return %c0_i32, %c0_i32_0 : i32, i32
  }
  func.func @transform_4(%arg0: i32) -> (i32, i32) {
    %c0_i32 = arith.constant 0 : i32
    %c0_i32_0 = arith.constant 0 : i32
    %c0_i32_1 = arith.constant 0 : i32
    return %c0_i32, %c0_i32_0 : i32, i32
  }
  func.func @transform_5(%arg0: i32) -> (i32, i32) {
    %c0_i32 = arith.constant 0 : i32
    %c0_i32_0 = arith.constant 0 : i32
    return %arg0, %c0_i32 : i32, i32
  }
}

</mosaic_0001>

<llo_original>
// kernel: simplenet_forward.1
$region0: #{simplenet_forward.1}
  #allocation0 [shape = 'u32[]', space=smem, size = 0x4, offset = 0x4, fixed_abs, tag = 'smem constant byte address 0x4 - core index']
  #allocation1 [shape = 'u32[72,128]{1,0:T(1,128)}', space=vmem, size = 0x9000, scoped, tag = 'internal scratch']
  %s0 = inlined_call_operand.vmem [shape: f32[2,784], index: 0, kind: input, shape index: {}]
  %s1 = inlined_call_operand.hbm [shape: f32[784,128], index: 1, kind: input, shape index: {}]
  %s2 = inlined_call_operand.vmem [shape: f32[1,128], index: 2, kind: input, shape index: {}]
  %s3 = inlined_call_operand.vmem [shape: f32[128,128], index: 3, kind: input, shape index: {}]
  %s4 = inlined_call_operand.vmem [shape: f32[1,128], index: 4, kind: input, shape index: {}]
  %s5 = inlined_call_operand.hbm [shape: f32[2,128], index: 5, kind: output, shape index: {}]
  %s6 = sld [smem:[#allocation0]]
  $region34: #{simplenet_forward.1} parent=0
    _
  %s8 = ssub.s32 1, %s6
  %s9 = scalar_select 0, %s8, %s6
  $region1: #{simplenet_forward.1} parent=0
    #allocation2 [shape = 'u8[401408]{0}', space=vmem, size = 0x62000, scoped, tag = 'input window, operand 1, single buffered']
    #allocation3 [shape = 's32[1]{0}', space=sflag, size = 0x4, scoped, tag = 'scoped memory for simplenet_forward.1']
    #allocation4 [shape = 's32[1]{0}', space=sflag, size = 0x4, scoped, tag = 'scoped memory for simplenet_forward.1']
    #allocation5 [shape = 'u8[4096]{0}', space=vmem, size = 0x1000, scoped, tag = 'output window, operand 0, single buffered']
    %10 = vsyncpa [#allocation3], 0
    %11 = vsyncpa [#allocation4], 0
    // Predicated region
    $region2: #{simplenet_forward.1} parent=1 // pred_check
      _
    $region3: #{simplenet_forward.1} parent=1 // pred_check_branch
      %13 = sbr.rel (0) target = $region5
    $region4: #{simplenet_forward.1} parent=1 // pred_region
      _
    $region5: #{simplenet_forward.1} parent=1 // pred_fallthru
      _
    // Predicated region
    $region6: #{simplenet_forward.1} parent=1 // pred_check
      _
    $region7: #{simplenet_forward.1} parent=1 // pred_check_branch
      %15 = sbr.rel (0) target = $region9
    $region8: #{simplenet_forward.1} parent=1 // pred_region
      %17 = vsyncadd [#allocation3], 0
      %s18 = sshll.u32 %s1, 4
      %s19 = int_to_ptr.hbm [resolvable:$true] %s18
      %s20 = sshll.u32 [#allocation2], 4
      %s21 = int_to_ptr.vmem [resolvable:$true] %s20
      %26 = dma.hbm_to_vmem [thread:$0]  %s19, 12544, %s21, [#allocation3], 128, 128, 8
    $region9: #{simplenet_forward.1} parent=1 // pred_fallthru
      _
    // Predicated region
    $region10: #{simplenet_forward.1} parent=1 // pred_check
      _
    $region11: #{simplenet_forward.1} parent=1 // pred_check_branch
      %28 = sbr.rel (0) target = $region13
    $region12: #{simplenet_forward.1} parent=1 // pred_region
      _
    $region13: #{simplenet_forward.1} parent=1 // pred_fallthru
      _
    // Predicated region
    $region14: #{simplenet_forward.1} parent=1 // pred_check
      _
    $region15: #{simplenet_forward.1} parent=1 // pred_check_branch
      %30 = sbr.rel (0) target = $region17
    $region16: #{simplenet_forward.1} parent=1 // pred_region
      _
    $region17: #{simplenet_forward.1} parent=1 // pred_fallthru
      _
    // Predicated region
    $region18: #{simplenet_forward.1} parent=1 // pred_check
      _
    $region19: #{simplenet_forward.1} parent=1 // pred_check_branch
      %32 = sbr.rel (0) target = $region21
    $region20: #{simplenet_forward.1} parent=1 // pred_region
      _
    $region21: #{simplenet_forward.1} parent=1 // pred_fallthru
      _
    // Predicated region
    $region22: #{simplenet_forward.1} parent=1 // pred_check
      _
    $region23: #{simplenet_forward.1} parent=1 // pred_check_branch
      %34 = sbr.rel (0) target = $region25
    $region24: #{simplenet_forward.1} parent=1 // pred_region
      %36 = dma.done [#allocation3], 12544
    $region25: #{simplenet_forward.1} parent=1 // pred_fallthru
      _
    %v37 = vld [vmem:[%s0] sm:$0xff]
    %v38 = vld [vmem:[%s0 + $0x8] sm:$0x3f]
    %v39 = vld [vmem:[%s0 + $0xe] sm:$0xff]
    %v40 = vld [vmem:[%s0 + $0x16] sm:$0x3f]
    %v41 = vld [vmem:[%s0 + $0x1c] sm:$0xff]
    %v42 = vld [vmem:[%s0 + $0x24] sm:$0x3f]
    %v43 = vld [vmem:[%s0 + $0x2a] sm:$0xff]
    %v44 = vld [vmem:[%s0 + $0x32] sm:$0x3f]
    %v45 = vld [vmem:[#allocation2] sm:$0xff]
    %v46 = vld [vmem:[#allocation2 + $0x8] sm:$0xff]
    %v47 = vld [vmem:[#allocation2 + $0x10] sm:$0xff]
    %v48 = vld [vmem:[#allocation2 + $0x18] sm:$0xff]
    %v49 = vld [vmem:[#allocation2 + $0x20] sm:$0xff]
    %v50 = vld [vmem:[#allocation2 + $0x28] sm:$0xff]
    %v51 = vld [vmem:[#allocation2 + $0x30] sm:$0xff]
    %v52 = vld [vmem:[#allocation2 + $0x38] sm:$0xff]
    %v53 = vld [vmem:[#allocation2 + $0x40] sm:$0xff]
    %v54 = vld [vmem:[#allocation2 + $0x48] sm:$0xff]
    %v55 = vld [vmem:[#allocation2 + $0x50] sm:$0xff]
    %v56 = vld [vmem:[#allocation2 + $0x58] sm:$0xff]
    %v57 = vld [vmem:[#allocation2 + $0x60] sm:$0xff]
    %v58 = vld [vmem:[#allocation2 + $0x68] sm:$0xff]
    %v59 = vld [vmem:[#allocation2 + $0x70] sm:$0xff]
    %v60 = vld [vmem:[#allocation2 + $0x78] sm:$0xff]
    %v61 = vld [vmem:[#allocation2 + $0x80] sm:$0xff]
    %v62 = vld [vmem:[#allocation2 + $0x88] sm:$0xff]
    %v63 = vld [vmem:[#allocation2 + $0x90] sm:$0xff]
    %v64 = vld [vmem:[#allocation2 + $0x98] sm:$0xff]
    %v65 = vld [vmem:[#allocation2 + $0xa0] sm:$0xff]
    %v66 = vld [vmem:[#allocation2 + $0xa8] sm:$0xff]
    %v67 = vld [vmem:[#allocation2 + $0xb0] sm:$0xff]
    %v68 = vld [vmem:[#allocation2 + $0xb8] sm:$0xff]
    %v69 = vld [vmem:[#allocation2 + $0xc0] sm:$0xff]
    %v70 = vld [vmem:[#allocation2 + $0xc8] sm:$0xff]
    %v71 = vld [vmem:[#allocation2 + $0xd0] sm:$0xff]
    %v72 = vld [vmem:[#allocation2 + $0xd8] sm:$0xff]
    %v73 = vld [vmem:[#allocation2 + $0xe0] sm:$0xff]
    %v74 = vld [vmem:[#allocation2 + $0xe8] sm:$0xff]
    %v75 = vld [vmem:[#allocation2 + $0xf0] sm:$0xff]
    %v76 = vld [vmem:[#allocation2 + $0xf8] sm:$0xff]
    %v77 = vld [vmem:[#allocation2 + $0x100] sm:$0xff]
    %v78 = vld [vmem:[#allocation2 + $0x108] sm:$0xff]
    %v79 = vld [vmem:[#allocation2 + $0x110] sm:$0xff]
    %v80 = vld [vmem:[#allocation2 + $0x118] sm:$0xff]
    %v81 = vld [vmem:[#allocation2 + $0x120] sm:$0xff]
    %v82 = vld [vmem:[#allocation2 + $0x128] sm:$0xff]
    %v83 = vld [vmem:[#allocation2 + $0x130] sm:$0xff]
    %v84 = vld [vmem:[#allocation2 + $0x138] sm:$0xff]
    %v85 = vld [vmem:[#allocation2 + $0x140] sm:$0xff]
    %v86 = vld [vmem:[#allocation2 + $0x148] sm:$0xff]
    %v87 = vld [vmem:[#allocation2 + $0x150] sm:$0xff]
    %v88 = vld [vmem:[#allocation2 + $0x158] sm:$0xff]
    %v89 = vld [vmem:[#allocation2 + $0x160] sm:$0xff]
    %v90 = vld [vmem:[#allocation2 + $0x168] sm:$0xff]
    %v91 = vld [vmem:[#allocation2 + $0x170] sm:$0xff]
    %v92 = vld [vmem:[#allocation2 + $0x178] sm:$0xff]
    %v93 = vld [vmem:[#allocation2 + $0x180] sm:$0xff]
    %v94 = vld [vmem:[#allocation2 + $0x188] sm:$0xff]
    %v95 = vld [vmem:[#allocation2 + $0x190] sm:$0xff]
    %v96 = vld [vmem:[#allocation2 + $0x198] sm:$0xff]
    %v97 = vld [vmem:[#allocation2 + $0x1a0] sm:$0xff]
    %v98 = vld [vmem:[#allocation2 + $0x1a8] sm:$0xff]
    %v99 = vld [vmem:[#allocation2 + $0x1b0] sm:$0xff]
    %v100 = vld [vmem:[#allocation2 + $0x1b8] sm:$0xff]
    %v101 = vld [vmem:[#allocation2 + $0x1c0] sm:$0xff]
    %v102 = vld [vmem:[#allocation2 + $0x1c8] sm:$0xff]
    %v103 = vld [vmem:[#allocation2 + $0x1d0] sm:$0xff]
    %v104 = vld [vmem:[#allocation2 + $0x1d8] sm:$0xff]
    %v105 = vld [vmem:[#allocation2 + $0x1e0] sm:$0xff]
    %v106 = vld [vmem:[#allocation2 + $0x1e8] sm:$0xff]
    %v107 = vld [vmem:[#allocation2 + $0x1f0] sm:$0xff]
    %v108 = vld [vmem:[#allocation2 + $0x1f8] sm:$0xff]
    %v109 = vld [vmem:[#allocation2 + $0x200] sm:$0xff]
    %v110 = vld [vmem:[#allocation2 + $0x208] sm:$0xff]
    %v111 = vld [vmem:[#allocation2 + $0x210] sm:$0xff]
    %v112 = vld [vmem:[#allocation2 + $0x218] sm:$0xff]
    %v113 = vld [vmem:[#allocation2 + $0x220] sm:$0xff]
    %v114 = vld [vmem:[#allocation2 + $0x228] sm:$0xff]
    %v115 = vld [vmem:[#allocation2 + $0x230] sm:$0xff]
    %v116 = vld [vmem:[#allocation2 + $0x238] sm:$0xff]
    %v117 = vld [vmem:[#allocation2 + $0x240] sm:$0xff]
    %v118 = vld [vmem:[#allocation2 + $0x248] sm:$0xff]
    %v119 = vld [vmem:[#allocation2 + $0x250] sm:$0xff]
    %v120 = vld [vmem:[#allocation2 + $0x258] sm:$0xff]
    %v121 = vld [vmem:[#allocation2 + $0x260] sm:$0xff]
    %v122 = vld [vmem:[#allocation2 + $0x268] sm:$0xff]
    %v123 = vld [vmem:[#allocation2 + $0x270] sm:$0xff]
    %v124 = vld [vmem:[#allocation2 + $0x278] sm:$0xff]
    %v125 = vld [vmem:[#allocation2 + $0x280] sm:$0xff]
    %v126 = vld [vmem:[#allocation2 + $0x288] sm:$0xff]
    %v127 = vld [vmem:[#allocation2 + $0x290] sm:$0xff]
    %v128 = vld [vmem:[#allocation2 + $0x298] sm:$0xff]
    %v129 = vld [vmem:[#allocation2 + $0x2a0] sm:$0xff]
    %v130 = vld [vmem:[#allocation2 + $0x2a8] sm:$0xff]
    %v131 = vld [vmem:[#allocation2 + $0x2b0] sm:$0xff]
    %v132 = vld [vmem:[#allocation2 + $0x2b8] sm:$0xff]
    %v133 = vld [vmem:[#allocation2 + $0x2c0] sm:$0xff]
    %v134 = vld [vmem:[#allocation2 + $0x2c8] sm:$0xff]
    %v135 = vld [vmem:[#allocation2 + $0x2d0] sm:$0xff]
    %v136 = vld [vmem:[#allocation2 + $0x2d8] sm:$0xff]
    %v137 = vld [vmem:[#allocation2 + $0x2e0] sm:$0xff]
    %v138 = vld [vmem:[#allocation2 + $0x2e8] sm:$0xff]
    %v139 = vld [vmem:[#allocation2 + $0x2f0] sm:$0xff]
    %v140 = vld [vmem:[#allocation2 + $0x2f8] sm:$0xff]
    %v141 = vld [vmem:[#allocation2 + $0x300] sm:$0xff]
    %v142 = vld [vmem:[#allocation2 + $0x308] sm:$0xff]
    %v143 = vld [vmem:[%s2] sm:$0x1]
    %v145 = vperm.slane %v143, 0
    %155 = vst [vmem:[#allocation1] ss:$4 sm:$0xff] %v37
    %s156 = scalar_lea.vmem [#allocation1], 1
    %157 = vst [vmem:[%s156] ss:$4 sm:$0xff] %v39
    %s158 = scalar_lea.vmem [#allocation1], 2
    %159 = vst [vmem:[%s158] ss:$4 sm:$0xff] %v41
    %s160 = scalar_lea.vmem [#allocation1], 3
    %161 = vst [vmem:[%s160] ss:$4 sm:$0xff] %v43
    %s162 = scalar_lea.vmem [#allocation1], 32
    %163 = vst [vmem:[%s162] ss:$4 sm:$0xff] %v38
    %s164 = scalar_lea.vmem [#allocation1], 33
    %165 = vst [vmem:[%s164] ss:$4 sm:$0xff] %v40
    %s166 = scalar_lea.vmem [#allocation1], 34
    %167 = vst [vmem:[%s166] ss:$4 sm:$0xff] %v42
    %s168 = scalar_lea.vmem [#allocation1], 35
    %169 = vst [vmem:[%s168] ss:$4 sm:$0xff] %v44
    %v170 = vld.sshfl [vmem:[#allocation1] sm:$0xff pattern:$0x73625140]
    %v171 = vld.sshfl [vmem:[#allocation1 + $0x8] sm:$0xff pattern:$0x73625140]
    %v172 = vld.sshfl [vmem:[#allocation1 + $0x10] sm:$0xff pattern:$0x73625140]
    %v173 = vld.sshfl [vmem:[#allocation1 + $0x18] sm:$0xff pattern:$0x73625140]
    %v174 = vld.sshfl [vmem:[#allocation1 + $0x20] sm:$0xff pattern:$0x73625140]
    %v175 = vld.sshfl [vmem:[#allocation1 + $0x28] sm:$0xff pattern:$0x73625140]
    %v176 = vld.sshfl [vmem:[#allocation1 + $0x30] sm:$0xff pattern:$0x73625140]
    %vm183 = vcmask 130048
    %v184 = vsel %vm183, %v176, 0
    %186 = vmatpush.msra.mxu0 %v60
    %187 = vmatpush.msra.mxu0 %v59
    %188 = vmatpush.msra.mxu0 %v58
    %189 = vmatpush.msra.mxu0 %v57
    %190 = vmatpush.msra.mxu0 %v56
    %191 = vmatpush.msra.mxu0 %v55
    %192 = vmatpush.msra.mxu0 %v54
    %193 = vmatpush.msra.mxu0 %v53
    %194 = vmatpush.msra.mxu0 %v52
    %195 = vmatpush.msra.mxu0 %v51
    %196 = vmatpush.msra.mxu0 %v50
    %197 = vmatpush.msra.mxu0 %v49
    %198 = vmatpush.msra.mxu0 %v48
    %199 = vmatpush.msra.mxu0 %v47
    %200 = vmatpush.msra.mxu0 %v46
    %201 = vmatpush.msra.mxu0 %v45
    %202 = vmatmul.f32.gmra.mxu0 %v170
    %v203 = vpop.f32.mrf.mxu0
    %v204 = vadd.f32 %v145, %v203
    %205 = vdwg.mxu0
    %206 = vmatpush.msra.mxu0 %v76
    %207 = vmatpush.msra.mxu0 %v75
    %208 = vmatpush.msra.mxu0 %v74
    %209 = vmatpush.msra.mxu0 %v73
    %210 = vmatpush.msra.mxu0 %v72
    %211 = vmatpush.msra.mxu0 %v71
    %212 = vmatpush.msra.mxu0 %v70
    %213 = vmatpush.msra.mxu0 %v69
    %214 = vmatpush.msra.mxu0 %v68
    %215 = vmatpush.msra.mxu0 %v67
    %216 = vmatpush.msra.mxu0 %v66
    %217 = vmatpush.msra.mxu0 %v65
    %218 = vmatpush.msra.mxu0 %v64
    %219 = vmatpush.msra.mxu0 %v63
    %220 = vmatpush.msra.mxu0 %v62
    %221 = vmatpush.msra.mxu0 %v61
    %222 = vmatmul.f32.gmra.mxu0 %v171
    %v223 = vpop.f32.mrf.mxu0
    %v224 = vadd.f32 %v204, %v223
    %225 = vdwg.mxu0
    %226 = vmatpush.msra.mxu0 %v92
    %227 = vmatpush.msra.mxu0 %v91
    %228 = vmatpush.msra.mxu0 %v90
    %229 = vmatpush.msra.mxu0 %v89
    %230 = vmatpush.msra.mxu0 %v88
    %231 = vmatpush.msra.mxu0 %v87
    %232 = vmatpush.msra.mxu0 %v86
    %233 = vmatpush.msra.mxu0 %v85
    %234 = vmatpush.msra.mxu0 %v84
    %235 = vmatpush.msra.mxu0 %v83
    %236 = vmatpush.msra.mxu0 %v82
    %237 = vmatpush.msra.mxu0 %v81
    %238 = vmatpush.msra.mxu0 %v80
    %239 = vmatpush.msra.mxu0 %v79
    %240 = vmatpush.msra.mxu0 %v78
    %241 = vmatpush.msra.mxu0 %v77
    %242 = vmatmul.f32.gmra.mxu0 %v172
    %v243 = vpop.f32.mrf.mxu0
    %v244 = vadd.f32 %v224, %v243
    %245 = vdwg.mxu0
    %246 = vmatpush.msra.mxu0 %v108
    %247 = vmatpush.msra.mxu0 %v107
    %248 = vmatpush.msra.mxu0 %v106
    %249 = vmatpush.msra.mxu0 %v105
    %250 = vmatpush.msra.mxu0 %v104
    %251 = vmatpush.msra.mxu0 %v103
    %252 = vmatpush.msra.mxu0 %v102
    %253 = vmatpush.msra.mxu0 %v101
    %254 = vmatpush.msra.mxu0 %v100
    %255 = vmatpush.msra.mxu0 %v99
    %256 = vmatpush.msra.mxu0 %v98
    %257 = vmatpush.msra.mxu0 %v97
    %258 = vmatpush.msra.mxu0 %v96
    %259 = vmatpush.msra.mxu0 %v95
    %260 = vmatpush.msra.mxu0 %v94
    %261 = vmatpush.msra.mxu0 %v93
    %262 = vmatmul.f32.gmra.mxu0 %v173
    %v263 = vpop.f32.mrf.mxu0
    %v264 = vadd.f32 %v244, %v263
    %265 = vdwg.mxu0
    %266 = vmatpush.msra.mxu0 %v124
    %267 = vmatpush.msra.mxu0 %v123
    %268 = vmatpush.msra.mxu0 %v122
    %269 = vmatpush.msra.mxu0 %v121
    %270 = vmatpush.msra.mxu0 %v120
    %271 = vmatpush.msra.mxu0 %v119
    %272 = vmatpush.msra.mxu0 %v118
    %273 = vmatpush.msra.mxu0 %v117
    %274 = vmatpush.msra.mxu0 %v116
    %275 = vmatpush.msra.mxu0 %v115
    %276 = vmatpush.msra.mxu0 %v114
    %277 = vmatpush.msra.mxu0 %v113
    %278 = vmatpush.msra.mxu0 %v112
    %279 = vmatpush.msra.mxu0 %v111
    %280 = vmatpush.msra.mxu0 %v110
    %281 = vmatpush.msra.mxu0 %v109
    %282 = vmatmul.f32.gmra.mxu0 %v174
    %v283 = vpop.f32.mrf.mxu0
    %v284 = vadd.f32 %v264, %v283
    %285 = vdwg.mxu0
    %286 = vmatpush.msra.mxu0 %v140
    %287 = vmatpush.msra.mxu0 %v139
    %288 = vmatpush.msra.mxu0 %v138
    %289 = vmatpush.msra.mxu0 %v137
    %290 = vmatpush.msra.mxu0 %v136
    %291 = vmatpush.msra.mxu0 %v135
    %292 = vmatpush.msra.mxu0 %v134
    %293 = vmatpush.msra.mxu0 %v133
    %294 = vmatpush.msra.mxu0 %v132
    %295 = vmatpush.msra.mxu0 %v131
    %296 = vmatpush.msra.mxu0 %v130
    %297 = vmatpush.msra.mxu0 %v129
    %298 = vmatpush.msra.mxu0 %v128
    %299 = vmatpush.msra.mxu0 %v127
    %300 = vmatpush.msra.mxu0 %v126
    %301 = vmatpush.msra.mxu0 %v125
    %302 = vmatmul.f32.gmra.mxu0 %v175
    %v303 = vpop.f32.mrf.mxu0
    %v304 = vadd.f32 %v284, %v303
    %305 = vdwg.mxu0
    %306 = vmatpush.msra.mxu0 0.0
    %307 = vmatpush.msra.mxu0 0.0
    %308 = vmatpush.msra.mxu0 0.0
    %309 = vmatpush.msra.mxu0 0.0
    %310 = vmatpush.msra.mxu0 0.0
    %311 = vmatpush.msra.mxu0 0.0
    %312 = vmatpush.msra.mxu0 0.0
    %313 = vmatpush.msra.mxu0 0.0
    %314 = vmatpush.msra.mxu0 0.0
    %315 = vmatpush.msra.mxu0 0.0
    %316 = vmatpush.msra.mxu0 0.0
    %317 = vmatpush.msra.mxu0 0.0
    %318 = vmatpush.msra.mxu0 0.0
    %319 = vmatpush.msra.mxu0 0.0
    %320 = vmatpush.msra.mxu0 %v142
    %321 = vmatpush.msra.mxu0 %v141
    %322 = vmatmul.f32.gmra.mxu0 %v184
    %v323 = vpop.f32.mrf.mxu0
    %v324 = vadd.f32 %v304, %v323
    %325 = vdwg.mxu0
    %v326 = vmax.f32 %v324, 0.0
    %v327 = vld [vmem:[%s3] sm:$0xff]
    %v328 = vld [vmem:[%s3 + $0x8] sm:$0xff]
    %v329 = vld [vmem:[%s3 + $0x10] sm:$0xff]
    %v330 = vld [vmem:[%s3 + $0x18] sm:$0xff]
    %v331 = vld [vmem:[%s3 + $0x20] sm:$0xff]
    %v332 = vld [vmem:[%s3 + $0x28] sm:$0xff]
    %v333 = vld [vmem:[%s3 + $0x30] sm:$0xff]
    %v334 = vld [vmem:[%s3 + $0x38] sm:$0xff]
    %v335 = vld [vmem:[%s3 + $0x40] sm:$0xff]
    %v336 = vld [vmem:[%s3 + $0x48] sm:$0xff]
    %v337 = vld [vmem:[%s3 + $0x50] sm:$0xff]
    %v338 = vld [vmem:[%s3 + $0x58] sm:$0xff]
    %v339 = vld [vmem:[%s3 + $0x60] sm:$0xff]
    %v340 = vld [vmem:[%s3 + $0x68] sm:$0xff]
    %v341 = vld [vmem:[%s3 + $0x70] sm:$0xff]
    %v342 = vld [vmem:[%s3 + $0x78] sm:$0xff]
    %v343 = vld [vmem:[%s4] sm:$0x1]
    %v345 = vperm.slane %v343, 0
    %347 = vmatpush.msra.mxu0 %v342
    %348 = vmatpush.msra.mxu0 %v341
    %349 = vmatpush.msra.mxu0 %v340
    %350 = vmatpush.msra.mxu0 %v339
    %351 = vmatpush.msra.mxu0 %v338
    %352 = vmatpush.msra.mxu0 %v337
    %353 = vmatpush.msra.mxu0 %v336
    %354 = vmatpush.msra.mxu0 %v335
    %355 = vmatpush.msra.mxu0 %v334
    %356 = vmatpush.msra.mxu0 %v333
    %357 = vmatpush.msra.mxu0 %v332
    %358 = vmatpush.msra.mxu0 %v331
    %359 = vmatpush.msra.mxu0 %v330
    %360 = vmatpush.msra.mxu0 %v329
    %361 = vmatpush.msra.mxu0 %v328
    %362 = vmatpush.msra.mxu0 %v327
    %363 = vmatmul.f32.gmra.mxu0 %v326
    %v364 = vpop.f32.mrf.mxu0
    %v365 = vadd.f32 %v345, %v364
    %366 = vdwg.mxu0
    %367 = vst [vmem:[#allocation5] sm:$0xff] %v365
    // Predicated region
    $region26: #{simplenet_forward.1} parent=1 // pred_check
      _
    $region27: #{simplenet_forward.1} parent=1 // pred_check_branch
      %369 = sbr.rel (0) target = $region29
    $region28: #{simplenet_forward.1} parent=1 // pred_region
      %371 = vsyncadd [#allocation4], 96
      %s372 = sshll.u32 [#allocation5], 4
      %s373 = int_to_ptr.vmem [resolvable:$true] %s372
      %s374 = sshll.u32 %s5, 4
      %s375 = int_to_ptr.hbm [resolvable:$true] %s374
      %380 = dma.vmem_to_hbm [thread:$0]  %s373, 32, %s375, [#allocation4], 32, 32, 2
    $region29: #{simplenet_forward.1} parent=1 // pred_fallthru
      _
    // Predicated region
    $region30: #{simplenet_forward.1} parent=1 // pred_check
      _
    $region31: #{simplenet_forward.1} parent=1 // pred_check_branch
      %382 = sbr.rel (0) target = $region33
    $region32: #{simplenet_forward.1} parent=1 // pred_region
      %384 = dma.done [#allocation4], 128
    $region33: #{simplenet_forward.1} parent=1 // pred_fallthru
      _
    %385 = vsyncpa [#allocation3], 1
    %386 = vsyncpa [#allocation4], 1

</llo_original>
